<compile_context>
chip_gen: v7x
topology: tpu7x:2x2x1
jax: 0.10.0
libtpu: 0.0.40
codegen_flags: <defaults>
</compile_context>

<pallas_src>
import functools
import math

import numpy as np
import jax
import jax.numpy as jnp
from jax.experimental import pallas as pl
from jax.experimental.pallas import tpu as pltpu


def _shift_lanes(x, shift):
    """y[:, c] = x[:, (c + shift) mod N] for a static shift along the lane axis."""
    n = x.shape[-1]
    s = shift % n
    if s == 0:
        return x
    return jnp.concatenate([x[:, s:], x[:, :s]], axis=-1)


def _attention2d_kernel(x_ref, w1_ref, b1_ref, w2_ref, b2_ref, mask_ref, o_ref,
                        *, k1, stride):
    """One lane-dense block of `block_b` batch windows.

    x_ref   : (c_start, NB)      folded input, NB = block_b * W (W = padded window)
    w1_ref  : (H, k1*c_start)    fc1 weight, BN-folded, taps stacked along columns
    b1_ref  : (H, 1)             BN-folded bias
    w2_ref  : (K, 3*H)           fc2 weight (already / temperature), taps stacked
    b2_ref  : (K, 1)             fc2 bias   (already / temperature)
    mask_ref: (2, NB)            0/1 boundary masks for the left/right fc2 taps
    o_ref   : (K, NB)            softmax attention weights (valid cols extracted
                                 by the wrapper)
    """
    xp = x_ref[...]                                              # (c_start, NB)

    # ---- fc1 as one im2col matmul: taps stacked along the sublane axis ----
    xcol = jnp.concatenate([_shift_lanes(xp, dk) for dk in range(k1)], axis=0)
    h = jnp.dot(w1_ref[...], xcol, preferred_element_type=jnp.float32)
    h = jnp.maximum(h + b1_ref[...], 0.0)                        # BN folded, then ReLU

    # ---- fc2 (kernel 3, padding 1) as one im2col matmul ----
    # Boundary masks emulate the zero padding between the folded batch windows.
    left = _shift_lanes(h, -stride) * mask_ref[0:1, :]
    right = _shift_lanes(h, stride) * mask_ref[1:2, :]
    hcol = jnp.concatenate([left, h, right], axis=0)             # (3H, NB)
    logits = jnp.dot(w2_ref[...], hcol, preferred_element_type=jnp.float32)
    logits = logits + b2_ref[...]                                # temperature folded

    # ---- softmax over the K channels (sublane axis) ----
    m = jnp.max(logits, axis=0, keepdims=True)
    e = jnp.exp(logits - m)
    o_ref[...] = e / jnp.sum(e, axis=0, keepdims=True)


def attention2d_forward(x, params, *, kernel_size, stride, padding, temperature,
                        eps=1e-5, block_b=None):
    B, in_planes, map_size, T = x.shape
    c_start = in_planes * map_size
    k1 = kernel_size
    t_pad = T + 2 * padding
    t_out = (t_pad - k1) // stride + 1

    w1 = params["w1"].astype(jnp.float32)            # (H, c_start, k1)
    w2 = params["w2"].astype(jnp.float32)            # (K, H, 3)
    H = w1.shape[0]
    K = w2.shape[0]

    # ---- fold eval-mode BatchNorm into fc1, and 1/temperature into fc2 ----
    scale = params["bn_gamma"] * jax.lax.rsqrt(params["bn_var"] + eps)       # (H,)
    w1f = w1 * scale[:, None, None]
    b1 = (params["bn_beta"] - params["bn_mean"] * scale).reshape(H, 1)
    W1 = jnp.transpose(w1f, (0, 2, 1)).reshape(H, k1 * c_start)              # tap-major
    W2 = jnp.transpose(w2, (0, 2, 1)).reshape(K, 3 * H) / temperature
    b2 = (params["b2"] / temperature).reshape(K, 1).astype(jnp.float32)

    # ---- lane-dense layout: fold batch onto the lane axis ----
    w_win = -(-t_pad // 8) * 8                       # per-batch padded window width
    if block_b is None:
        base = 128 // math.gcd(w_win, 128)           # make NB a multiple of 128 ...
        block_b = base * max(1, -(-256 // (base * w_win)))   # ... and >= 256 lanes
        # (for very large B on v7x, keep >=2 grid steps so both TensorCores work)
    nb = block_b * w_win
    b_pad = -(-B // block_b) * block_b

    x_flat = x.reshape(B, c_start, T).astype(jnp.float32)
    xw = jnp.pad(x_flat, ((0, b_pad - B), (0, 0), (padding, w_win - T - padding)))
    x_cat = jnp.transpose(xw, (1, 0, 2)).reshape(c_start, b_pad * w_win)
    # TODO(synk): for very large inputs this single pad+transpose layout pass could
    #             be folded into the kernel with manual DMAs to save one HBM pass.

    # 0/1 boundary masks for fc2's left (d=-1) and right (d=+1) taps.
    col = np.arange(nb) % w_win
    masks = jnp.asarray(np.stack([(col >= stride),
                                  (col < (t_out - 1) * stride)]).astype(np.float32))

    kernel = functools.partial(_attention2d_kernel, k1=k1, stride=stride)
    out = pl.pallas_call(
        kernel,
        out_shape=jax.ShapeDtypeStruct((K, b_pad * w_win), jnp.float32),
        grid_spec=pltpu.PrefetchScalarGridSpec(
            num_scalar_prefetch=0,
            grid=(b_pad // block_b,),
            in_specs=[
                pl.BlockSpec((c_start, nb), lambda i: (0, i)),
                pl.BlockSpec((H, k1 * c_start), lambda i: (0, 0)),
                pl.BlockSpec((H, 1), lambda i: (0, 0)),
                pl.BlockSpec((K, 3 * H), lambda i: (0, 0)),
                pl.BlockSpec((K, 1), lambda i: (0, 0)),
                pl.BlockSpec((2, nb), lambda i: (0, 0)),
            ],
            out_specs=pl.BlockSpec((K, nb), lambda i: (0, i)),
        ),
        compiler_params=pltpu.CompilerParams(
            dimension_semantics=("parallel",)),
    )(x_cat, W1, b1, W2, b2, masks)

    # extract the valid columns and restore the PyTorch (B, K, t_out) layout
    out = out.reshape(K, b_pad, w_win)[:, :B, :t_out]
    return jnp.transpose(out, (1, 0, 2))


def init_params(key, in_planes, map_size, kernel_size, K):
    """Deterministic parameter init mirroring the PyTorch __init__."""
    c_start = in_planes * map_size
    hidden = c_start // 8
    k1, k2 = jax.random.split(key)
    # kaiming_normal_(mode='fan_out', nonlinearity='relu'): std = sqrt(2/(out_ch*ksize))
    std1 = (2.0 / (hidden * kernel_size)) ** 0.5
    w1 = jax.random.normal(k1, (hidden, c_start, kernel_size), jnp.float32) * std1
    std2 = (2.0 / (K * 3)) ** 0.5
    w2 = jax.random.normal(k2, (K, hidden, 3), jnp.float32) * std2
    return dict(
        w1=w1,
        w2=w2,
        b2=jnp.zeros((K,), jnp.float32),
        bn_gamma=jnp.ones((hidden,), jnp.float32),
        bn_beta=jnp.zeros((hidden,), jnp.float32),
        bn_mean=jnp.zeros((hidden,), jnp.float32),
        bn_var=jnp.ones((hidden,), jnp.float32),
    )


def _reference(x, params, *, kernel_size, stride, padding, temperature, eps=1e-5):
    """Pure-JAX reference of the PyTorch forward (eval-mode BN)."""
    B, in_planes, map_size, T = x.shape
    xf = x.reshape(B, in_planes * map_size, T).astype(jnp.float32)
    dn = ("NCH", "OIH", "NCH")
    y = jax.lax.conv_general_dilated(xf, params["w1"], (stride,),
                                     [(padding, padding)], dimension_numbers=dn)
    y = ((y - params["bn_mean"][None, :, None])
         * jax.lax.rsqrt(params["bn_var"][None, :, None] + eps)
         * params["bn_gamma"][None, :, None] + params["bn_beta"][None, :, None])
    y = jnp.maximum(y, 0.0)
    y = jax.lax.conv_general_dilated(y, params["w2"], (1,), [(1, 1)],
                                     dimension_numbers=dn)
    y = y + params["b2"][None, :, None]
    return jax.nn.softmax(y / temperature, axis=1)


if __name__ == "__main__":
    # module config: attention2d(in_planes=8, map_size=8, kernel_size=3,
    #                            stride=1, padding=1, K=4, temperature=31)
    in_planes, map_size = 8, 8
    kernel_size, stride, padding = 3, 1, 1
    K, temperature = 4, 31
    assert temperature % 3 == 1
    B, T = 2, 16

    key = jax.random.PRNGKey(0)
    kx, kp = jax.random.split(key)
    x = jax.random.normal(kx, (B, in_planes, map_size, T), jnp.float32)
    params = init_params(kp, in_planes, map_size, kernel_size, K)

    out = attention2d_forward(x, params, kernel_size=kernel_size, stride=stride,
                              padding=padding, temperature=temperature)
    out = jax.block_until_ready(out)

    ref = _reference(x, params, kernel_size=kernel_size, stride=stride,
                     padding=padding, temperature=temperature)
    assert out.shape == ref.shape == (B, K, T)
    assert jnp.allclose(out, ref, rtol=1e-4, atol=1e-5), float(jnp.max(jnp.abs(out - ref)))

    print("KERNEL_OK")
</pallas_src>

<mosaic_0001>
module attributes {stable_mosaic.version = 11 : i64} {
  func.func @_attention2d_kernel(%arg0: i32, %arg1: memref<64x384xf32, #tpu.memory_space<vmem>>, %arg2: memref<8x192xf32, #tpu.memory_space<vmem>>, %arg3: memref<8x1xf32, #tpu.memory_space<vmem>>, %arg4: memref<4x24xf32, #tpu.memory_space<vmem>>, %arg5: memref<4x1xf32, #tpu.memory_space<vmem>>, %arg6: memref<2x384xf32, #tpu.memory_space<vmem>>, %arg7: memref<4x384xf32, #tpu.memory_space<vmem>>) attributes {dimension_semantics = [#tpu.dimension_semantics<parallel>], iteration_bounds = array<i64: 1>, scalar_prefetch = 0 : i64, scratch_operands = 0 : i64, tpu.core_type = #tpu.core_type<tc>, window_params = [{transform_indices = @transform_0, window_bounds = array<i64: 64, 384>}, {pipeline_mode = #tpu.pipeline_mode<synchronous>, transform_indices = @transform_1, window_bounds = array<i64: 8, 192>}, {pipeline_mode = #tpu.pipeline_mode<synchronous>, transform_indices = @transform_2, window_bounds = array<i64: 8, 1>}, {pipeline_mode = #tpu.pipeline_mode<synchronous>, transform_indices = @transform_3, window_bounds = array<i64: 4, 24>}, {pipeline_mode = #tpu.pipeline_mode<synchronous>, transform_indices = @transform_4, window_bounds = array<i64: 4, 1>}, {pipeline_mode = #tpu.pipeline_mode<synchronous>, transform_indices = @transform_5, window_bounds = array<i64: 2, 384>}, {transform_indices = @transform_6, window_bounds = array<i64: 4, 384>}]} {
    %c0 = arith.constant 0 : index
    %c0_0 = arith.constant 0 : index
    %0 = vector.load %arg1[%c0, %c0_0] : memref<64x384xf32, #tpu.memory_space<vmem>>, vector<64x384xf32>
    %1 = vector.extract_strided_slice %0 {offsets = [0, 1], sizes = [64, 383], strides = [1, 1]} : vector<64x384xf32> to vector<64x383xf32>
    %2 = vector.extract_strided_slice %0 {offsets = [0, 0], sizes = [64, 1], strides = [1, 1]} : vector<64x384xf32> to vector<64x1xf32>
    %3 = tpu.concatenate %1, %2 in 1 : vector<64x383xf32>, vector<64x1xf32> -> vector<64x384xf32>
    %4 = vector.extract_strided_slice %0 {offsets = [0, 2], sizes = [64, 382], strides = [1, 1]} : vector<64x384xf32> to vector<64x382xf32>
    %5 = vector.extract_strided_slice %0 {offsets = [0, 0], sizes = [64, 2], strides = [1, 1]} : vector<64x384xf32> to vector<64x2xf32>
    %6 = tpu.concatenate %4, %5 in 1 : vector<64x382xf32>, vector<64x2xf32> -> vector<64x384xf32>
    %7 = tpu.concatenate %0, %3, %6 in 0 : vector<64x384xf32>, vector<64x384xf32>, vector<64x384xf32> -> vector<192x384xf32>
    %c0_1 = arith.constant 0 : index
    %c0_2 = arith.constant 0 : index
    %8 = vector.load %arg2[%c0_1, %c0_2] : memref<8x192xf32, #tpu.memory_space<vmem>>, vector<8x192xf32>
    %cst = arith.constant dense<0.000000e+00> : vector<8x384xf32>
    %9 = tpu.matmul %8, %7, %cst {dimension_numbers = #tpu.dot_dimension_numbers<[1], [0], [0], [1], [0, 0, 1, 1], [], []>} : vector<8x192xf32>, vector<192x384xf32>, vector<8x384xf32> -> vector<8x384xf32>
    %c0_3 = arith.constant 0 : index
    %c0_4 = arith.constant 0 : index
    %10 = vector.load %arg3[%c0_3, %c0_4] : memref<8x1xf32, #tpu.memory_space<vmem>>, vector<8x1xf32>
    %11 = vector.broadcast %10 : vector<8x1xf32> to vector<8x384xf32>
    %12 = arith.addf %9, %11 : vector<8x384xf32>
    %cst_5 = arith.constant 0.000000e+00 : f32
    %13 = vector.broadcast %cst_5 : f32 to vector<8x384xf32>
    %14 = arith.maximumf %12, %13 : vector<8x384xf32>
    %15 = vector.extract_strided_slice %14 {offsets = [0, 383], sizes = [8, 1], strides = [1, 1]} : vector<8x384xf32> to vector<8x1xf32>
    %16 = vector.extract_strided_slice %14 {offsets = [0, 0], sizes = [8, 383], strides = [1, 1]} : vector<8x384xf32> to vector<8x383xf32>
    %17 = tpu.concatenate %15, %16 in 1 : vector<8x1xf32>, vector<8x383xf32> -> vector<8x384xf32>
    %c0_6 = arith.constant 0 : index
    %c0_7 = arith.constant 0 : index
    %18 = vector.load %arg6[%c0_6, %c0_7] : memref<2x384xf32, #tpu.memory_space<vmem>>, vector<1x384xf32>
    %19 = vector.broadcast %18 : vector<1x384xf32> to vector<8x384xf32>
    %20 = arith.mulf %17, %19 : vector<8x384xf32>
    %21 = vector.extract_strided_slice %14 {offsets = [0, 1], sizes = [8, 383], strides = [1, 1]} : vector<8x384xf32> to vector<8x383xf32>
    %22 = vector.extract_strided_slice %14 {offsets = [0, 0], sizes = [8, 1], strides = [1, 1]} : vector<8x384xf32> to vector<8x1xf32>
    %23 = tpu.concatenate %21, %22 in 1 : vector<8x383xf32>, vector<8x1xf32> -> vector<8x384xf32>
    %c1 = arith.constant 1 : index
    %c0_8 = arith.constant 0 : index
    %24 = vector.load %arg6[%c1, %c0_8] : memref<2x384xf32, #tpu.memory_space<vmem>>, vector<1x384xf32>
    %25 = vector.broadcast %24 : vector<1x384xf32> to vector<8x384xf32>
    %26 = arith.mulf %23, %25 : vector<8x384xf32>
    %27 = tpu.concatenate %20, %14, %26 in 0 : vector<8x384xf32>, vector<8x384xf32>, vector<8x384xf32> -> vector<24x384xf32>
    %c0_9 = arith.constant 0 : index
    %c0_10 = arith.constant 0 : index
    %28 = vector.load %arg4[%c0_9, %c0_10] : memref<4x24xf32, #tpu.memory_space<vmem>>, vector<4x24xf32>
    %cst_11 = arith.constant dense<0.000000e+00> : vector<4x384xf32>
    %29 = tpu.matmul %28, %27, %cst_11 {dimension_numbers = #tpu.dot_dimension_numbers<[1], [0], [0], [1], [0, 0, 1, 1], [], []>} : vector<4x24xf32>, vector<24x384xf32>, vector<4x384xf32> -> vector<4x384xf32>
    %c0_12 = arith.constant 0 : index
    %c0_13 = arith.constant 0 : index
    %30 = vector.load %arg5[%c0_12, %c0_13] : memref<4x1xf32, #tpu.memory_space<vmem>>, vector<4x1xf32>
    %31 = vector.broadcast %30 : vector<4x1xf32> to vector<4x384xf32>
    %32 = arith.addf %29, %31 : vector<4x384xf32>
    %cst_14 = arith.constant dense<0xFF800000> : vector<384xf32>
    %33 = vector.multi_reduction <maximumf>, %32, %cst_14 [0] : vector<4x384xf32> to vector<384xf32>
    %34 = vector.shape_cast %33 : vector<384xf32> to vector<1x384xf32>
    %35 = vector.broadcast %34 : vector<1x384xf32> to vector<4x384xf32>
    %36 = arith.subf %32, %35 : vector<4x384xf32>
    %37 = math.exp %36 : vector<4x384xf32>
    %cst_15 = arith.constant dense<0.000000e+00> : vector<384xf32>
    %38 = vector.multi_reduction <add>, %37, %cst_15 [0] : vector<4x384xf32> to vector<384xf32>
    %39 = vector.shape_cast %38 : vector<384xf32> to vector<1x384xf32>
    %40 = vector.broadcast %39 : vector<1x384xf32> to vector<4x384xf32>
    %41 = arith.divf %37, %40 : vector<4x384xf32>
    %c0_16 = arith.constant 0 : index
    %c0_17 = arith.constant 0 : index
    %42 = vector.load %arg7[%c0_16, %c0_17] : memref<4x384xf32, #tpu.memory_space<vmem>>, vector<4x384xf32>
    tpu.vector_store %arg7[%c0_16, %c0_17], %41 {strides = array<i32>} : memref<4x384xf32, #tpu.memory_space<vmem>>, vector<4x384xf32>,
    return
  }
  func.func @transform_0(%arg0: i32) -> (i32, i32) {
    %c0_i32 = arith.constant 0 : i32
    %c0_i32_0 = arith.constant 0 : i32
    return %c0_i32, %arg0 : i32, i32
  }
  func.func @transform_1(%arg0: i32) -> (i32, i32) {
    %c0_i32 = arith.constant 0 : i32
    %c0_i32_0 = arith.constant 0 : i32
    %c0_i32_1 = arith.constant 0 : i32
    return %c0_i32, %c0_i32_0 : i32, i32
  }
  func.func @transform_2(%arg0: i32) -> (i32, i32) {
    %c0_i32 = arith.constant 0 : i32
    %c0_i32_0 = arith.constant 0 : i32
    %c0_i32_1 = arith.constant 0 : i32
    return %c0_i32, %c0_i32_0 : i32, i32
  }
  func.func @transform_3(%arg0: i32) -> (i32, i32) {
    %c0_i32 = arith.constant 0 : i32
    %c0_i32_0 = arith.constant 0 : i32
    %c0_i32_1 = arith.constant 0 : i32
    return %c0_i32, %c0_i32_0 : i32, i32
  }
  func.func @transform_4(%arg0: i32) -> (i32, i32) {
    %c0_i32 = arith.constant 0 : i32
    %c0_i32_0 = arith.constant 0 : i32
    %c0_i32_1 = arith.constant 0 : i32
    return %c0_i32, %c0_i32_0 : i32, i32
  }
  func.func @transform_5(%arg0: i32) -> (i32, i32) {
    %c0_i32 = arith.constant 0 : i32
    %c0_i32_0 = arith.constant 0 : i32
    %c0_i32_1 = arith.constant 0 : i32
    return %c0_i32, %c0_i32_0 : i32, i32
  }
  func.func @transform_6(%arg0: i32) -> (i32, i32) {
    %c0_i32 = arith.constant 0 : i32
    %c0_i32_0 = arith.constant 0 : i32
    return %c0_i32, %arg0 : i32, i32
  }
}

</mosaic_0001>

<llo_original>
// kernel: tpu_custom_call.1
$region0: #{tpu_custom_call.1}
  #allocation0 [shape = 'u32[]', space=smem, size = 0x4, offset = 0x4, fixed_abs, tag = 'smem constant byte address 0x4 - core index']
  #allocation1 [shape = 'u32[144,128]{1,0:T(1,128)}', space=vmem, size = 0x12000, scoped, tag = 'internal scratch']
  %s0 = inlined_call_operand.hbm [shape: f32[64,384], index: 0, kind: input, shape index: {}]
  %s1 = inlined_call_operand.vmem [shape: f32[8,192], index: 1, kind: input, shape index: {}]
  %s2 = inlined_call_operand.vmem [shape: f32[8,1], index: 2, kind: input, shape index: {}]
  %s3 = inlined_call_operand.hbm [shape: f32[4,24], index: 3, kind: input, shape index: {}]
  %s4 = inlined_call_operand.vmem [shape: f32[4,1], index: 4, kind: input, shape index: {}]
  %s5 = inlined_call_operand.vmem [shape: f32[2,384], index: 5, kind: input, shape index: {}]
  %s6 = inlined_call_operand.hbm [shape: f32[4,384], index: 6, kind: output, shape index: {}]
  %s7 = sld [smem:[#allocation0]]
  $region42: #{tpu_custom_call.1} parent=0
    _
  %s9 = ssub.s32 1, %s7
  %s10 = scalar_select 0, %s9, %s7
  $region1: #{tpu_custom_call.1} parent=0
    #allocation2 [shape = 'u8[98304]{0}', space=vmem, size = 0x18000, scoped, tag = 'input window, operand 0, single buffered']
    #allocation3 [shape = 's32[1]{0}', space=sflag, size = 0x4, scoped, tag = 'scoped memory for tpu_custom_call.1']
    #allocation4 [shape = 's32[1]{0}', space=sflag, size = 0x4, scoped, tag = 'scoped memory for tpu_custom_call.1']
    #allocation5 [shape = 'u8[2048]{0}', space=vmem, size = 0x800, scoped, tag = 'input window, operand 3, single buffered']
    #allocation6 [shape = 's32[1]{0}', space=sflag, size = 0x4, scoped, tag = 'scoped memory for tpu_custom_call.1']
    #allocation7 [shape = 'u8[6144]{0}', space=vmem, size = 0x1800, scoped, tag = 'output window, operand 0, single buffered']
    %11 = vsyncpa [#allocation3], 0
    %12 = vsyncpa [#allocation6], 0
    %13 = vsyncpa [#allocation4], 0
    // Predicated region
    $region2: #{tpu_custom_call.1} parent=1 // pred_check
      _
    $region3: #{tpu_custom_call.1} parent=1 // pred_check_branch
      %15 = sbr.rel (0) target = $region5
    $region4: #{tpu_custom_call.1} parent=1 // pred_region
      %s17 = ssub.s32 3072, 3072
      %18 = vsyncadd [#allocation3], %s17
      %s19 = sshll.u32 [#allocation2], 4
      %s20 = int_to_ptr.vmem [resolvable:$true] %s19
      %25 = dma.hbm_to_vmem [thread:$0]  %s0, 3072, %s20, [#allocation3], 384, 384, 24
    $region5: #{tpu_custom_call.1} parent=1 // pred_fallthru
      _
    // Predicated region
    $region6: #{tpu_custom_call.1} parent=1 // pred_check
      _
    $region7: #{tpu_custom_call.1} parent=1 // pred_check_branch
      %27 = sbr.rel (0) target = $region9
    $region8: #{tpu_custom_call.1} parent=1 // pred_region
      _
    $region9: #{tpu_custom_call.1} parent=1 // pred_fallthru
      _
    // Predicated region
    $region10: #{tpu_custom_call.1} parent=1 // pred_check
      _
    $region11: #{tpu_custom_call.1} parent=1 // pred_check_branch
      %29 = sbr.rel (0) target = $region13
    $region12: #{tpu_custom_call.1} parent=1 // pred_region
      _
    $region13: #{tpu_custom_call.1} parent=1 // pred_fallthru
      _
    // Predicated region
    $region14: #{tpu_custom_call.1} parent=1 // pred_check
      _
    $region15: #{tpu_custom_call.1} parent=1 // pred_check_branch
      %31 = sbr.rel (0) target = $region17
    $region16: #{tpu_custom_call.1} parent=1 // pred_region
      %s33 = ssub.s32 64, 64
      %34 = vsyncadd [#allocation6], %s33
      %s36 = sshll.u32 [#allocation5], 4
      %s37 = int_to_ptr.vmem [resolvable:$true] %s36
      %39 = dma.hbm_to_vmem [thread:$0]  %s3, 64, %s37, [#allocation6]
    $region17: #{tpu_custom_call.1} parent=1 // pred_fallthru
      _
    // Predicated region
    $region18: #{tpu_custom_call.1} parent=1 // pred_check
      _
    $region19: #{tpu_custom_call.1} parent=1 // pred_check_branch
      %41 = sbr.rel (0) target = $region21
    $region20: #{tpu_custom_call.1} parent=1 // pred_region
      _
    $region21: #{tpu_custom_call.1} parent=1 // pred_fallthru
      _
    // Predicated region
    $region22: #{tpu_custom_call.1} parent=1 // pred_check
      _
    $region23: #{tpu_custom_call.1} parent=1 // pred_check_branch
      %43 = sbr.rel (0) target = $region25
    $region24: #{tpu_custom_call.1} parent=1 // pred_region
      _
    $region25: #{tpu_custom_call.1} parent=1 // pred_fallthru
      _
    // Predicated region
    $region26: #{tpu_custom_call.1} parent=1 // pred_check
      _
    $region27: #{tpu_custom_call.1} parent=1 // pred_check_branch
      %45 = sbr.rel (0) target = $region29
    $region28: #{tpu_custom_call.1} parent=1 // pred_region
      %46 = dma.done [#allocation3], 3072
    $region29: #{tpu_custom_call.1} parent=1 // pred_fallthru
      _
    // Predicated region
    $region30: #{tpu_custom_call.1} parent=1 // pred_check
      _
    $region31: #{tpu_custom_call.1} parent=1 // pred_check_branch
      %48 = sbr.rel (0) target = $region33
    $region32: #{tpu_custom_call.1} parent=1 // pred_region
      %49 = dma.done [#allocation6], 64
    $region33: #{tpu_custom_call.1} parent=1 // pred_fallthru
      _
    %v50 = vld [vmem:[#allocation2] sm:$0xff]
    %v51 = vld [vmem:[#allocation2 + $0x8] sm:$0xff]
    %v52 = vld [vmem:[#allocation2 + $0x10] sm:$0xff]
    %v53 = vld [vmem:[#allocation2 + $0x18] sm:$0xff]
    %v54 = vld [vmem:[#allocation2 + $0x20] sm:$0xff]
    %v55 = vld [vmem:[#allocation2 + $0x28] sm:$0xff]
    %v56 = vld [vmem:[#allocation2 + $0x30] sm:$0xff]
    %v57 = vld [vmem:[#allocation2 + $0x38] sm:$0xff]
    %v58 = vld [vmem:[#allocation2 + $0x40] sm:$0xff]
    %v59 = vld [vmem:[#allocation2 + $0x48] sm:$0xff]
    %v60 = vld [vmem:[#allocation2 + $0x50] sm:$0xff]
    %v61 = vld [vmem:[#allocation2 + $0x58] sm:$0xff]
    %v62 = vld [vmem:[#allocation2 + $0x60] sm:$0xff]
    %v63 = vld [vmem:[#allocation2 + $0x68] sm:$0xff]
    %v64 = vld [vmem:[#allocation2 + $0x70] sm:$0xff]
    %v65 = vld [vmem:[#allocation2 + $0x78] sm:$0xff]
    %v66 = vld [vmem:[#allocation2 + $0x80] sm:$0xff]
    %v67 = vld [vmem:[#allocation2 + $0x88] sm:$0xff]
    %v68 = vld [vmem:[#allocation2 + $0x90] sm:$0xff]
    %v69 = vld [vmem:[#allocation2 + $0x98] sm:$0xff]
    %v70 = vld [vmem:[#allocation2 + $0xa0] sm:$0xff]
    %v71 = vld [vmem:[#allocation2 + $0xa8] sm:$0xff]
    %v72 = vld [vmem:[#allocation2 + $0xb0] sm:$0xff]
    %v73 = vld [vmem:[#allocation2 + $0xb8] sm:$0xff]
    %98 = vrot.lane.b32.xlu0 %v50, 127
    %v99 = vpop.permute.xlu0 %98
    %100 = vrot.lane.b32.xlu0 %v51, 127
    %v101 = vpop.permute.xlu0 %100
    %102 = vrot.lane.b32.xlu0 %v52, 127
    %v103 = vpop.permute.xlu0 %102
    %104 = vrot.lane.b32.xlu0 %v53, 127
    %v105 = vpop.permute.xlu0 %104
    %106 = vrot.lane.b32.xlu0 %v54, 127
    %v107 = vpop.permute.xlu0 %106
    %108 = vrot.lane.b32.xlu0 %v55, 127
    %v109 = vpop.permute.xlu0 %108
    %110 = vrot.lane.b32.xlu0 %v56, 127
    %v111 = vpop.permute.xlu0 %110
    %112 = vrot.lane.b32.xlu0 %v57, 127
    %v113 = vpop.permute.xlu0 %112
    %114 = vrot.lane.b32.xlu0 %v58, 127
    %v115 = vpop.permute.xlu0 %114
    %116 = vrot.lane.b32.xlu0 %v59, 127
    %v117 = vpop.permute.xlu0 %116
    %118 = vrot.lane.b32.xlu0 %v60, 127
    %v119 = vpop.permute.xlu0 %118
    %120 = vrot.lane.b32.xlu0 %v61, 127
    %v121 = vpop.permute.xlu0 %120
    %122 = vrot.lane.b32.xlu0 %v62, 127
    %v123 = vpop.permute.xlu0 %122
    %124 = vrot.lane.b32.xlu0 %v63, 127
    %v125 = vpop.permute.xlu0 %124
    %126 = vrot.lane.b32.xlu0 %v64, 127
    %v127 = vpop.permute.xlu0 %126
    %128 = vrot.lane.b32.xlu0 %v65, 127
    %v129 = vpop.permute.xlu0 %128
    %130 = vrot.lane.b32.xlu0 %v66, 127
    %v131 = vpop.permute.xlu0 %130
    %132 = vrot.lane.b32.xlu0 %v67, 127
    %v133 = vpop.permute.xlu0 %132
    %134 = vrot.lane.b32.xlu0 %v68, 127
    %v135 = vpop.permute.xlu0 %134
    %136 = vrot.lane.b32.xlu0 %v69, 127
    %v137 = vpop.permute.xlu0 %136
    %138 = vrot.lane.b32.xlu0 %v70, 127
    %v139 = vpop.permute.xlu0 %138
    %140 = vrot.lane.b32.xlu0 %v71, 127
    %v141 = vpop.permute.xlu0 %140
    %142 = vrot.lane.b32.xlu0 %v72, 127
    %v143 = vpop.permute.xlu0 %142
    %144 = vrot.lane.b32.xlu0 %v73, 127
    %v145 = vpop.permute.xlu0 %144
    %vm146 = vcmask 1039360
    %v147 = vsel %vm146, %v99, %v101
    %v148 = vsel %vm146, %v101, %v103
    %v149 = vsel %vm146, %v105, %v107
    %v150 = vsel %vm146, %v107, %v109
    %v151 = vsel %vm146, %v111, %v113
    %v152 = vsel %vm146, %v113, %v115
    %v153 = vsel %vm146, %v117, %v119
    %v154 = vsel %vm146, %v119, %v121
    %v155 = vsel %vm146, %v123, %v125
    %v156 = vsel %vm146, %v125, %v127
    %v157 = vsel %vm146, %v129, %v131
    %v158 = vsel %vm146, %v131, %v133
    %v159 = vsel %vm146, %v135, %v137
    %v160 = vsel %vm146, %v137, %v139
    %v161 = vsel %vm146, %v141, %v143
    %v162 = vsel %vm146, %v143, %v145
    %v195 = vsel %vm146, %v103, %v99
    %v196 = vsel %vm146, %v109, %v105
    %v197 = vsel %vm146, %v115, %v111
    %v198 = vsel %vm146, %v121, %v117
    %v199 = vsel %vm146, %v127, %v123
    %v200 = vsel %vm146, %v133, %v129
    %v201 = vsel %vm146, %v139, %v135
    %v202 = vsel %vm146, %v145, %v141
    %203 = vrot.lane.b32.xlu0 %v50, 126
    %v204 = vpop.permute.xlu0 %203
    %205 = vrot.lane.b32.xlu0 %v51, 126
    %v206 = vpop.permute.xlu0 %205
    %207 = vrot.lane.b32.xlu0 %v52, 126
    %v208 = vpop.permute.xlu0 %207
    %209 = vrot.lane.b32.xlu0 %v53, 126
    %v210 = vpop.permute.xlu0 %209
    %211 = vrot.lane.b32.xlu0 %v54, 126
    %v212 = vpop.permute.xlu0 %211
    %213 = vrot.lane.b32.xlu0 %v55, 126
    %v214 = vpop.permute.xlu0 %213
    %215 = vrot.lane.b32.xlu0 %v56, 126
    %v216 = vpop.permute.xlu0 %215
    %217 = vrot.lane.b32.xlu0 %v57, 126
    %v218 = vpop.permute.xlu0 %217
    %219 = vrot.lane.b32.xlu0 %v58, 126
    %v220 = vpop.permute.xlu0 %219
    %221 = vrot.lane.b32.xlu0 %v59, 126
    %v222 = vpop.permute.xlu0 %221
    %223 = vrot.lane.b32.xlu0 %v60, 126
    %v224 = vpop.permute.xlu0 %223
    %225 = vrot.lane.b32.xlu0 %v61, 126
    %v226 = vpop.permute.xlu0 %225
    %227 = vrot.lane.b32.xlu0 %v62, 126
    %v228 = vpop.permute.xlu0 %227
    %229 = vrot.lane.b32.xlu0 %v63, 126
    %v230 = vpop.permute.xlu0 %229
    %231 = vrot.lane.b32.xlu0 %v64, 126
    %v232 = vpop.permute.xlu0 %231
    %233 = vrot.lane.b32.xlu0 %v65, 126
    %v234 = vpop.permute.xlu0 %233
    %235 = vrot.lane.b32.xlu0 %v66, 126
    %v236 = vpop.permute.xlu0 %235
    %237 = vrot.lane.b32.xlu0 %v67, 126
    %v238 = vpop.permute.xlu0 %237
    %239 = vrot.lane.b32.xlu0 %v68, 126
    %v240 = vpop.permute.xlu0 %239
    %241 = vrot.lane.b32.xlu0 %v69, 126
    %v242 = vpop.permute.xlu0 %241
    %243 = vrot.lane.b32.xlu0 %v70, 126
    %v244 = vpop.permute.xlu0 %243
    %245 = vrot.lane.b32.xlu0 %v71, 126
    %v246 = vpop.permute.xlu0 %245
    %247 = vrot.lane.b32.xlu0 %v72, 126
    %v248 = vpop.permute.xlu0 %247
    %249 = vrot.lane.b32.xlu0 %v73, 126
    %v250 = vpop.permute.xlu0 %249
    %vm251 = vcmask 1031168
    %v252 = vsel %vm251, %v204, %v206
    %v253 = vsel %vm251, %v206, %v208
    %v254 = vsel %vm251, %v210, %v212
    %v255 = vsel %vm251, %v212, %v214
    %v256 = vsel %vm251, %v216, %v218
    %v257 = vsel %vm251, %v218, %v220
    %v258 = vsel %vm251, %v222, %v224
    %v259 = vsel %vm251, %v224, %v226
    %v260 = vsel %vm251, %v228, %v230
    %v261 = vsel %vm251, %v230, %v232
    %v262 = vsel %vm251, %v234, %v236
    %v263 = vsel %vm251, %v236, %v238
    %v264 = vsel %vm251, %v240, %v242
    %v265 = vsel %vm251, %v242, %v244
    %v266 = vsel %vm251, %v246, %v248
    %v267 = vsel %vm251, %v248, %v250
    %v300 = vsel %vm251, %v208, %v204
    %v301 = vsel %vm251, %v214, %v210
    %v302 = vsel %vm251, %v220, %v216
    %v303 = vsel %vm251, %v226, %v222
    %v304 = vsel %vm251, %v232, %v228
    %v305 = vsel %vm251, %v238, %v234
    %v306 = vsel %vm251, %v244, %v240
    %v307 = vsel %vm251, %v250, %v246
    %v308 = vld [vmem:[%s1] sm:$0xff]
    %v309 = vld [vmem:[%s1 + $0x8] sm:$0xff]
    %v310 = vld [vmem:[%s2] sm:$0xff]
    %312 = vset.pattern.permute.xlu0 0
    %313 = vperm.xlu0 %312, %v310
    %v314 = vpop.permute.xlu0 %313
    %vm316 = vcmask 523264
    %v318 = vsel %vm316, %v309, 0
    %320 = vmatprep.subr.mxu0 %v51
    %321 = vmatpush1.msra.mxu0 %v50
    %322 = vmatprep.subr.mxu0 %v54
    %323 = vmatpush1.msra.mxu0 %v53
    %324 = vmatprep.subr.mxu0 %v57
    %325 = vmatpush1.msra.mxu0 %v56
    %326 = vmatprep.subr.mxu0 %v60
    %327 = vmatpush1.msra.mxu0 %v59
    %328 = vmatprep.subr.mxu0 %v63
    %329 = vmatpush1.msra.mxu0 %v62
    %330 = vmatprep.subr.mxu0 %v66
    %331 = vmatpush1.msra.mxu0 %v65
    %332 = vmatprep.subr.mxu0 %v69
    %333 = vmatpush1.msra.mxu0 %v68
    %334 = vmatprep.subr.mxu0 %v72
    %335 = vmatpush1.msra.mxu0 %v71
    %336 = vmatprep.subr.mxu0 %v148
    %337 = vmatpush1.msra.mxu0 %v147
    %338 = vmatprep.subr.mxu0 %v150
    %339 = vmatpush1.msra.mxu0 %v149
    %340 = vmatprep.subr.mxu0 %v152
    %341 = vmatpush1.msra.mxu0 %v151
    %342 = vmatprep.subr.mxu0 %v154
    %343 = vmatpush1.msra.mxu0 %v153
    %344 = vmatprep.subr.mxu0 %v156
    %345 = vmatpush1.msra.mxu0 %v155
    %346 = vmatprep.subr.mxu0 %v158
    %347 = vmatpush1.msra.mxu0 %v157
    %348 = vmatprep.subr.mxu0 %v160
    %349 = vmatpush1.msra.mxu0 %v159
    %350 = vmatprep.subr.mxu0 %v162
    %351 = vmatpush1.msra.mxu0 %v161
    %352 = vmatprep.subr.mxu0 %v253
    %353 = vmatpush1.msra.mxu0 %v252
    %354 = vmatprep.subr.mxu0 %v255
    %355 = vmatpush1.msra.mxu0 %v254
    %356 = vmatprep.subr.mxu0 %v257
    %357 = vmatpush1.msra.mxu0 %v256
    %358 = vmatprep.subr.mxu0 %v259
    %359 = vmatpush1.msra.mxu0 %v258
    %360 = vmatprep.subr.mxu0 %v261
    %361 = vmatpush1.msra.mxu0 %v260
    %362 = vmatprep.subr.mxu0 %v263
    %363 = vmatpush1.msra.mxu0 %v262
    %364 = vmatprep.subr.mxu0 %v265
    %365 = vmatpush1.msra.mxu0 %v264
    %366 = vmatprep.subr.mxu0 %v267
    %367 = vmatpush1.msra.mxu0 %v266
    %368 = vmatprep.subr.mxu0 0.0
    %369 = vmatpush1.msra.mxu0 0.0
    %370 = vmatprep.subr.mxu0 0.0
    %371 = vmatpush1.msra.mxu0 0.0
    %372 = vmatprep.subr.mxu0 0.0
    %373 = vmatpush1.msra.mxu0 0.0
    %374 = vmatprep.subr.mxu0 0.0
    %375 = vmatpush1.msra.mxu0 0.0
    %376 = vmatprep.subr.mxu0 0.0
    %377 = vmatpush1.msra.mxu0 0.0
    %378 = vmatprep.subr.mxu0 0.0
    %379 = vmatpush1.msra.mxu0 0.0
    %380 = vmatprep.subr.mxu0 0.0
    %381 = vmatpush1.msra.mxu0 0.0
    %382 = vmatprep.subr.mxu0 0.0
    %383 = vmatpush1.msra.mxu0 0.0
    %384 = vmatprep.mubr.f32.mxu0 %v318
    %385 = vmatmul.mubr.f32.gmra.mrb[0].mxu0 %v308
    %v386 = vpop.f32.mrb[0].mxu0
    %v387 = vadd.f32 %v314, %v386
    %v388 = vpop.f32.mrb[0].mxu0
    %v389 = vadd.f32 %v314, %v388
    %390 = vdwg.mxu0
    %391 = vmatprep.subr.mxu0 0.0
    %392 = vmatpush1.msra.mxu0 %v52
    %393 = vmatprep.subr.mxu0 0.0
    %394 = vmatpush1.msra.mxu0 %v55
    %395 = vmatprep.subr.mxu0 0.0
    %396 = vmatpush1.msra.mxu0 %v58
    %397 = vmatprep.subr.mxu0 0.0
    %398 = vmatpush1.msra.mxu0 %v61
    %399 = vmatprep.subr.mxu0 0.0
    %400 = vmatpush1.msra.mxu0 %v64
    %401 = vmatprep.subr.mxu0 0.0
    %402 = vmatpush1.msra.mxu0 %v67
    %403 = vmatprep.subr.mxu0 0.0
    %404 = vmatpush1.msra.mxu0 %v70
    %405 = vmatprep.subr.mxu0 0.0
    %406 = vmatpush1.msra.mxu0 %v73
    %407 = vmatprep.subr.mxu0 0.0
    %408 = vmatpush1.msra.mxu0 %v195
    %409 = vmatprep.subr.mxu0 0.0
    %410 = vmatpush1.msra.mxu0 %v196
    %411 = vmatprep.subr.mxu0 0.0
    %412 = vmatpush1.msra.mxu0 %v197
    %413 = vmatprep.subr.mxu0 0.0
    %414 = vmatpush1.msra.mxu0 %v198
    %415 = vmatprep.subr.mxu0 0.0
    %416 = vmatpush1.msra.mxu0 %v199
    %417 = vmatprep.subr.mxu0 0.0
    %418 = vmatpush1.msra.mxu0 %v200
    %419 = vmatprep.subr.mxu0 0.0
    %420 = vmatpush1.msra.mxu0 %v201
    %421 = vmatprep.subr.mxu0 0.0
    %422 = vmatpush1.msra.mxu0 %v202
    %423 = vmatprep.subr.mxu0 0.0
    %424 = vmatpush1.msra.mxu0 %v300
    %425 = vmatprep.subr.mxu0 0.0
    %426 = vmatpush1.msra.mxu0 %v301
    %427 = vmatprep.subr.mxu0 0.0
    %428 = vmatpush1.msra.mxu0 %v302
    %429 = vmatprep.subr.mxu0 0.0
    %430 = vmatpush1.msra.mxu0 %v303
    %431 = vmatprep.subr.mxu0 0.0
    %432 = vmatpush1.msra.mxu0 %v304
    %433 = vmatprep.subr.mxu0 0.0
    %434 = vmatpush1.msra.mxu0 %v305
    %435 = vmatprep.subr.mxu0 0.0
    %436 = vmatpush1.msra.mxu0 %v306
    %437 = vmatprep.subr.mxu0 0.0
    %438 = vmatpush1.msra.mxu0 %v307
    %439 = vmatprep.subr.mxu0 0.0
    %440 = vmatpush1.msra.mxu0 0.0
    %441 = vmatprep.subr.mxu0 0.0
    %442 = vmatpush1.msra.mxu0 0.0
    %443 = vmatprep.subr.mxu0 0.0
    %444 = vmatpush1.msra.mxu0 0.0
    %445 = vmatprep.subr.mxu0 0.0
    %446 = vmatpush1.msra.mxu0 0.0
    %447 = vmatprep.subr.mxu0 0.0
    %448 = vmatpush1.msra.mxu0 0.0
    %449 = vmatprep.subr.mxu0 0.0
    %450 = vmatpush1.msra.mxu0 0.0
    %451 = vmatprep.subr.mxu0 0.0
    %452 = vmatpush1.msra.mxu0 0.0
    %453 = vmatprep.subr.mxu0 0.0
    %454 = vmatpush1.msra.mxu0 0.0
    %455 = vmatprep.mubr.f32.mxu0 %v318
    %456 = vmatmul.mubr.f32.gmra.mrb[0].mxu0 %v308
    %v457 = vpop.f32.mrb[0].mxu0
    %v458 = vadd.f32 %v314, %v457
    %v459 = vpop.f32.mrb[0].mxu0
    %460 = vdwg.mxu0
    %v461 = vmax.f32 %v387, 0.0
    %v462 = vmax.f32 %v389, 0.0
    %v463 = vmax.f32 %v458, 0.0
    %465 = vrot.lane.b32.xlu0 %v463, 1
    %v466 = vpop.permute.xlu0 %465
    %470 = vrot.lane.b32.xlu0 %v461, 1
    %v471 = vpop.permute.xlu0 %470
    %472 = vrot.lane.b32.xlu0 %v462, 1
    %v473 = vpop.permute.xlu0 %472
    %vm474 = vcmask 7168
    %v475 = vsel %vm474, %v471, %v473
    %v476 = vsel %vm474, %v473, %v466
    %v480 = vsel %vm474, %v466, %v471
    %v481 = vld [vmem:[%s5] ss:$2 sm:$0x7]
    %v483 = vlaneseq
    %v484 = vshrl.u32 %v483, 7
    %v485 = vsub.s32 0, %v484
    %v486 = vrot.slane %v481, %v485
    %v487 = vlaneseq
    %v488 = vshrl.u32 %v487, 7
    %v489 = vsub.s32 1, %v488
    %v490 = vrot.slane %v481, %v489
    %v491 = vlaneseq
    %v492 = vshrl.u32 %v491, 7
    %v493 = vsub.s32 2, %v492
    %v494 = vrot.slane %v481, %v493
    %v498 = vmul.f32 %v480, %v486
    %v499 = vmul.f32 %v475, %v490
    %v500 = vmul.f32 %v476, %v494
    %501 = vrot.lane.b32.xlu0 %v461, 127
    %v502 = vpop.permute.xlu0 %501
    %503 = vrot.lane.b32.xlu0 %v462, 127
    %v504 = vpop.permute.xlu0 %503
    %505 = vrot.lane.b32.xlu0 %v463, 127
    %v506 = vpop.permute.xlu0 %505
    %v507 = vsel %vm146, %v502, %v504
    %v508 = vsel %vm146, %v504, %v506
    %v513 = vsel %vm146, %v506, %v502
    %s514 = scalar_lea.vmem %s5, 1
    %v515 = vld [vmem:[%s514] ss:$2 sm:$0x7]
    %v517 = vlaneseq
    %v518 = vshrl.u32 %v517, 7
    %v519 = vsub.s32 0, %v518
    %v520 = vrot.slane %v515, %v519
    %v521 = vlaneseq
    %v522 = vshrl.u32 %v521, 7
    %v523 = vsub.s32 1, %v522
    %v524 = vrot.slane %v515, %v523
    %v525 = vlaneseq
    %v526 = vshrl.u32 %v525, 7
    %v527 = vsub.s32 2, %v526
    %v528 = vrot.slane %v515, %v527
    %v532 = vmul.f32 %v507, %v520
    %v533 = vmul.f32 %v508, %v524
    %v534 = vmul.f32 %v513, %v528
    %v535 = vld [vmem:[#allocation5] sm:$0xf]
    %v536 = vld [vmem:[%s4] sm:$0xf]
    %538 = vset.pattern.permute.xlu0 0
    %539 = vperm.xlu0 %538, %v536
    %v540 = vpop.permute.xlu0 %539
    %vm542 = vcmask 195584
    %v544 = vsel %vm542, %v535, 0
    %546 = vmatprep.subr.mxu0 %v499
    %547 = vmatpush1.msra.mxu0 %v498
    %548 = vmatprep.subr.mxu0 %v462
    %549 = vmatpush1.msra.mxu0 %v461
    %550 = vmatprep.subr.mxu0 %v533
    %551 = vmatpush1.msra.mxu0 %v532
    %552 = vmatprep.subr.mxu0 0.0
    %553 = vmatpush1.msra.mxu0 0.0
    %554 = vmatprep.subr.mxu0 0.0
    %555 = vmatpush1.msra.mxu0 0.0
    %556 = vmatprep.subr.mxu0 0.0
    %557 = vmatpush1.msra.mxu0 0.0
    %558 = vmatprep.subr.mxu0 0.0
    %559 = vmatpush1.msra.mxu0 0.0
    %560 = vmatprep.subr.mxu0 0.0
    %561 = vmatpush1.msra.mxu0 0.0
    %562 = vmatprep.subr.mxu0 0.0
    %563 = vmatpush1.msra.mxu0 0.0
    %564 = vmatprep.subr.mxu0 0.0
    %565 = vmatpush1.msra.mxu0 0.0
    %566 = vmatprep.subr.mxu0 0.0
    %567 = vmatpush1.msra.mxu0 0.0
    %568 = vmatprep.subr.mxu0 0.0
    %569 = vmatpush1.msra.mxu0 0.0
    %570 = vmatprep.subr.mxu0 0.0
    %571 = vmatpush1.msra.mxu0 0.0
    %572 = vmatprep.subr.mxu0 0.0
    %573 = vmatpush1.msra.mxu0 0.0
    %574 = vmatprep.subr.mxu0 0.0
    %575 = vmatpush1.msra.mxu0 0.0
    %576 = vmatprep.subr.mxu0 0.0
    %577 = vmatpush1.msra.mxu0 0.0
    %578 = vmatprep.subr.mxu0 0.0
    %579 = vmatpush1.msra.mxu0 0.0
    %580 = vmatprep.subr.mxu0 0.0
    %581 = vmatpush1.msra.mxu0 0.0
    %582 = vmatprep.subr.mxu0 0.0
    %583 = vmatpush1.msra.mxu0 0.0
    %584 = vmatprep.subr.mxu0 0.0
    %585 = vmatpush1.msra.mxu0 0.0
    %586 = vmatprep.subr.mxu0 0.0
    %587 = vmatpush1.msra.mxu0 0.0
    %588 = vmatprep.subr.mxu0 0.0
    %589 = vmatpush1.msra.mxu0 0.0
    %590 = vmatprep.subr.mxu0 0.0
    %591 = vmatpush1.msra.mxu0 0.0
    %592 = vmatprep.subr.mxu0 0.0
    %593 = vmatpush1.msra.mxu0 0.0
    %594 = vmatprep.subr.mxu0 0.0
    %595 = vmatpush1.msra.mxu0 0.0
    %596 = vmatprep.subr.mxu0 0.0
    %597 = vmatpush1.msra.mxu0 0.0
    %598 = vmatprep.subr.mxu0 0.0
    %599 = vmatpush1.msra.mxu0 0.0
    %600 = vmatprep.subr.mxu0 0.0
    %601 = vmatpush1.msra.mxu0 0.0
    %602 = vmatprep.subr.mxu0 0.0
    %603 = vmatpush1.msra.mxu0 0.0
    %604 = vmatprep.subr.mxu0 0.0
    %605 = vmatpush1.msra.mxu0 0.0
    %606 = vmatprep.subr.mxu0 0.0
    %607 = vmatpush1.msra.mxu0 0.0
    %608 = vmatprep.subr.mxu0 0.0
    %609 = vmatpush1.msra.mxu0 0.0
    %610 = vmatprep.mubr.f32.mxu0 0.0
    %611 = vmatmul.mubr.f32.gmra.mrb[0].mxu0 %v544
    %v612 = vpop.f32.mrb[0].mxu0
    %v613 = vadd.f32 %v540, %v612
    %v614 = vpop.f32.mrb[0].mxu0
    %v615 = vadd.f32 %v540, %v614
    %616 = vdwg.mxu0
    %617 = vmatprep.subr.mxu0 0.0
    %618 = vmatpush1.msra.mxu0 %v500
    %619 = vmatprep.subr.mxu0 0.0
    %620 = vmatpush1.msra.mxu0 %v463
    %621 = vmatprep.subr.mxu0 0.0
    %622 = vmatpush1.msra.mxu0 %v534
    %623 = vmatprep.subr.mxu0 0.0
    %624 = vmatpush1.msra.mxu0 0.0
    %625 = vmatprep.subr.mxu0 0.0
    %626 = vmatpush1.msra.mxu0 0.0
    %627 = vmatprep.subr.mxu0 0.0
    %628 = vmatpush1.msra.mxu0 0.0
    %629 = vmatprep.subr.mxu0 0.0
    %630 = vmatpush1.msra.mxu0 0.0
    %631 = vmatprep.subr.mxu0 0.0
    %632 = vmatpush1.msra.mxu0 0.0
    %633 = vmatprep.subr.mxu0 0.0
    %634 = vmatpush1.msra.mxu0 0.0
    %635 = vmatprep.subr.mxu0 0.0
    %636 = vmatpush1.msra.mxu0 0.0
    %637 = vmatprep.subr.mxu0 0.0
    %638 = vmatpush1.msra.mxu0 0.0
    %639 = vmatprep.subr.mxu0 0.0
    %640 = vmatpush1.msra.mxu0 0.0
    %641 = vmatprep.subr.mxu0 0.0
    %642 = vmatpush1.msra.mxu0 0.0
    %643 = vmatprep.subr.mxu0 0.0
    %644 = vmatpush1.msra.mxu0 0.0
    %645 = vmatprep.subr.mxu0 0.0
    %646 = vmatpush1.msra.mxu0 0.0
    %647 = vmatprep.subr.mxu0 0.0
    %648 = vmatpush1.msra.mxu0 0.0
    %649 = vmatprep.subr.mxu0 0.0
    %650 = vmatpush1.msra.mxu0 0.0
    %651 = vmatprep.subr.mxu0 0.0
    %652 = vmatpush1.msra.mxu0 0.0
    %653 = vmatprep.subr.mxu0 0.0
    %654 = vmatpush1.msra.mxu0 0.0
    %655 = vmatprep.subr.mxu0 0.0
    %656 = vmatpush1.msra.mxu0 0.0
    %657 = vmatprep.subr.mxu0 0.0
    %658 = vmatpush1.msra.mxu0 0.0
    %659 = vmatprep.subr.mxu0 0.0
    %660 = vmatpush1.msra.mxu0 0.0
    %661 = vmatprep.subr.mxu0 0.0
    %662 = vmatpush1.msra.mxu0 0.0
    %663 = vmatprep.subr.mxu0 0.0
    %664 = vmatpush1.msra.mxu0 0.0
    %665 = vmatprep.subr.mxu0 0.0
    %666 = vmatpush1.msra.mxu0 0.0
    %667 = vmatprep.subr.mxu0 0.0
    %668 = vmatpush1.msra.mxu0 0.0
    %669 = vmatprep.subr.mxu0 0.0
    %670 = vmatpush1.msra.mxu0 0.0
    %671 = vmatprep.subr.mxu0 0.0
    %672 = vmatpush1.msra.mxu0 0.0
    %673 = vmatprep.subr.mxu0 0.0
    %674 = vmatpush1.msra.mxu0 0.0
    %675 = vmatprep.subr.mxu0 0.0
    %676 = vmatpush1.msra.mxu0 0.0
    %677 = vmatprep.subr.mxu0 0.0
    %678 = vmatpush1.msra.mxu0 0.0
    %679 = vmatprep.subr.mxu0 0.0
    %680 = vmatpush1.msra.mxu0 0.0
    %681 = vmatprep.mubr.f32.mxu0 0.0
    %682 = vmatmul.mubr.f32.gmra.mrb[0].mxu0 %v544
    %v683 = vpop.f32.mrb[0].mxu0
    %v684 = vadd.f32 %v540, %v683
    %v685 = vpop.f32.mrb[0].mxu0
    %686 = vdwg.mxu0
    %vm687 = vcmask 1043456
    %v688 = vsel %vm687, %v613, -inf
    %v689 = vrot.slane %v688, 4
    %v690 = vmax.f32 %v688, %v689
    %v691 = vrot.slane %v690, 2
    %v692 = vmax.f32 %v690, %v691
    %v693 = vrot.slane %v692, 1
    %v694 = vmax.f32 %v692, %v693
    %v695 = vsel %vm687, %v615, -inf
    %v696 = vrot.slane %v695, 4
    %v697 = vmax.f32 %v695, %v696
    %v698 = vrot.slane %v697, 2
    %v699 = vmax.f32 %v697, %v698
    %v700 = vrot.slane %v699, 1
    %v701 = vmax.f32 %v699, %v700
    %v702 = vsel %vm687, %v684, -inf
    %v703 = vrot.slane %v702, 4
    %v704 = vmax.f32 %v702, %v703
    %v705 = vrot.slane %v704, 2
    %v706 = vmax.f32 %v704, %v705
    %v707 = vrot.slane %v706, 1
    %v708 = vmax.f32 %v706, %v707
    %v709 = vsub.f32 %v613, %v694
    %v710 = vsub.f32 %v615, %v701
    %v711 = vsub.f32 %v684, %v708
    %v712 = vmul.f32 %v709, 1.442695
    %v713 = vpow.pop %v712
    %v714 = vmul.f32 %v710, 1.442695
    %v715 = vpow.pop %v714
    %v716 = vmul.f32 %v711, 1.442695
    %v717 = vpow.pop %v716
    %v718 = vsel %vm687, %v713, 0.0
    %v719 = vrot.slane %v718, 4
    %v720 = vadd.f32 %v718, %v719
    %v721 = vrot.slane %v720, 2
    %v722 = vadd.f32 %v720, %v721
    %v723 = vrot.slane %v722, 1
    %v724 = vadd.f32 %v722, %v723
    %v725 = vsel %vm687, %v715, 0.0
    %v726 = vrot.slane %v725, 4
    %v727 = vadd.f32 %v725, %v726
    %v728 = vrot.slane %v727, 2
    %v729 = vadd.f32 %v727, %v728
    %v730 = vrot.slane %v729, 1
    %v731 = vadd.f32 %v729, %v730
    %v732 = vsel %vm687, %v717, 0.0
    %v733 = vrot.slane %v732, 4
    %v734 = vadd.f32 %v732, %v733
    %v735 = vrot.slane %v734, 2
    %v736 = vadd.f32 %v734, %v735
    %v737 = vrot.slane %v736, 1
    %v738 = vadd.f32 %v736, %v737
    %v739 = vrcp.pop %v724
    %v740 = vmul.f32 %v713, %v739
    %v741 = vrcp.pop %v731
    %v742 = vmul.f32 %v715, %v741
    %v743 = vrcp.pop %v738
    %v744 = vmul.f32 %v717, %v743
    %v747 = vcombine.low %v740, %v742
    %749 = vst [vmem:[#allocation7] sm:$0xff] %v747
    %750 = vst [vmem:[#allocation7 + $0x8] sm:$0xf] %v744
    // Predicated region
    $region34: #{tpu_custom_call.1} parent=1 // pred_check
      _
    $region35: #{tpu_custom_call.1} parent=1 // pred_check_branch
      %752 = sbr.rel (0) target = $region37
    $region36: #{tpu_custom_call.1} parent=1 // pred_region
      %s754 = ssub.s32 192, 192
      %755 = vsyncadd [#allocation4], %s754
      %s757 = sshll.u32 [#allocation7], 4
      %s758 = int_to_ptr.vmem [resolvable:$true] %s757
      %760 = dma.vmem_to_hbm [thread:$0]  %s758, 192, %s6, [#allocation4]
    $region37: #{tpu_custom_call.1} parent=1 // pred_fallthru
      _
    // Predicated region
    $region38: #{tpu_custom_call.1} parent=1 // pred_check
      _
    $region39: #{tpu_custom_call.1} parent=1 // pred_check_branch
      %762 = sbr.rel (0) target = $region41
    $region40: #{tpu_custom_call.1} parent=1 // pred_region
      %763 = dma.done [#allocation4], 192
    $region41: #{tpu_custom_call.1} parent=1 // pred_fallthru
      _
    %764 = vsyncpa [#allocation3], 1
    %765 = vsyncpa [#allocation6], 1
    %766 = vsyncpa [#allocation4], 1

</llo_original>
